<compile_context>
chip_gen: v7x
topology: tpu7x:2x2x1
jax: 0.10.0
libtpu: 0.0.40
codegen_flags: <defaults>
</compile_context>

<pallas_src>
import jax
import jax.numpy as jnp
from jax.experimental import pallas as pl
from jax.experimental.pallas import tpu as pltpu

_LANE = 128      # vreg lane width
_SUBLANE = 8     # vreg sublane count (f32)


def _round_up(n, m):
    return ((n + m - 1) // m) * m


# ----------------------------------------------------------------------------
# Fused 3-layer MLP kernel: (Linear + tanh) -> (Linear + tanh) -> Linear
# One grid step processes a (tb, .) tile of the batch; weights are resident.
# ----------------------------------------------------------------------------
def _massnet_kernel(x_ref, w0_ref, b0_ref, w1_ref, b1_ref, w2_ref, b2_ref,
                    o_ref, xpad_ref):
    in_dim = x_ref.shape[-1]
    out_dim = o_ref.shape[-1]

    # Stage the narrow x tile into a lane-dense, zero-padded VMEM buffer so
    # the layer-0 matmul is fully 128-lane aligned while the HBM read stays
    # (tb, in_dim).  The scratch is zeroed every step (not just step 0) so the
    # kernel stays correct when the "parallel" batch axis is split across
    # TensorCores; the zero-fill is ~1 vreg store per 8 rows (negligible).
    if in_dim == xpad_ref.shape[-1]:
        xpad_ref[...] = x_ref[...]
    else:
        xpad_ref[...] = jnp.zeros_like(xpad_ref)
        xpad_ref[:, :in_dim] = x_ref[...]
    x = xpad_ref[...]                                        # (tb, din_p) f32

    # layer 0: Linear(in -> hid) + tanh   (MXU matmul, f32 acc; EUP tanh)
    h = jnp.tanh(jnp.dot(x, w0_ref[...],
                         preferred_element_type=jnp.float32) + b0_ref[...])
    # hidden layer (num_layers = 1): Linear(hid -> hid) + tanh
    h = jnp.tanh(jnp.dot(h, w1_ref[...],
                         preferred_element_type=jnp.float32) + b1_ref[...])
    # output layer: Linear(hid -> out), no activation
    y = jnp.dot(h, w2_ref[...], preferred_element_type=jnp.float32) + b2_ref[...]

    # Slice the lane-padded result back to the true output width; the HBM
    # write for this block is only (tb, out_dim).
    o_ref[...] = y[:, :out_dim].astype(o_ref.dtype)


# ----------------------------------------------------------------------------
# One-time parameter preparation (hoisted out of the per-call path).
# ----------------------------------------------------------------------------
def prepare_params(params):
    """Pad the MLP parameters to lane-aligned (multiple-of-128) shapes ONCE.

    Zero padding keeps the math exact: padded x lanes hit zero weight rows,
    padded hidden columns are tanh(0 + 0) only when the bias is also padded
    with zeros -> they multiply zero weight rows of the next layer anyway, and
    padded output columns are sliced off in the kernel.
    """
    in_dim, hid = params["w0"].shape
    out_dim = params["w2"].shape[1]
    din_p, dh_p, dout_p = (_round_up(d, _LANE) for d in (in_dim, hid, out_dim))

    def pad2(a, rows, cols):
        z = jnp.zeros((rows, cols), jnp.float32)
        return z.at[: a.shape[0], : a.shape[1]].set(a.astype(jnp.float32))

    return {
        "w0": pad2(params["w0"], din_p, dh_p), "b0": pad2(params["b0"], 1, dh_p),
        "w1": pad2(params["w1"], dh_p, dh_p), "b1": pad2(params["b1"], 1, dh_p),
        "w2": pad2(params["w2"], dh_p, dout_p), "b2": pad2(params["b2"], 1, dout_p),
        "in_dim": in_dim, "hidden_dim": hid, "out_dim": out_dim,
    }


def massnet_forward(x, prep, *, block_b=1024):
    """Fused MassNet forward pass.

    x:    (B, input_dim) float32
    prep: output of prepare_params() (pre-padded f32 weights/biases).
    returns (B, output_dim) float32
    """
    B, in_dim = x.shape
    assert in_dim == prep["in_dim"], "input feature dim mismatch"
    hid, out_dim = prep["hidden_dim"], prep["out_dim"]
    w0, b0 = prep["w0"], prep["b0"]
    w1, b1 = prep["w1"], prep["b1"]
    w2, b2 = prep["w2"], prep["b2"]
    din_p = w0.shape[0]

    if x.dtype != jnp.float32:
        x = x.astype(jnp.float32)

    # --- batch tiling: balanced tiles (grid = cdiv, no whole-tile padding),
    # tile is a multiple of the 8-row sublane, and >= 2 grid steps whenever
    # the batch is splittable so both v7x TensorCores get work. ---
    block_b = max(_round_up(block_b, _SUBLANE), _SUBLANE)
    num_tiles = pl.cdiv(B, block_b)
    if B >= 2 * _SUBLANE:
        num_tiles = max(num_tiles, 2)
    tb = _round_up(pl.cdiv(B, num_tiles), _SUBLANE)
    grid = (pl.cdiv(B, tb),)

    resident = lambda a: pl.BlockSpec(a.shape, lambda i: (0, 0))

    flops = 2 * B * (in_dim * hid + hid * hid + hid * out_dim)
    param_bytes = 4 * sum(int(prep[k].size)
                          for k in ("w0", "b0", "w1", "b1", "w2", "b2"))
    cost = pl.CostEstimate(
        flops=flops,
        transcendentals=2 * B * hid,
        bytes_accessed=4 * B * (in_dim + out_dim) + param_bytes,
    )

    return pl.pallas_call(
        _massnet_kernel,
        out_shape=jax.ShapeDtypeStruct((B, out_dim), jnp.float32),
        grid=grid,
        in_specs=[
            pl.BlockSpec((tb, in_dim), lambda i: (i, 0)),   # unpadded x tile
            resident(w0), resident(b0),
            resident(w1), resident(b1),
            resident(w2), resident(b2),
        ],
        out_specs=pl.BlockSpec((tb, out_dim), lambda i: (i, 0)),  # unpadded y
        scratch_shapes=[pltpu.VMEM((tb, din_p), jnp.float32)],    # x staging
        compiler_params=pltpu.CompilerParams(
            dimension_semantics=("parallel",)),   # megacore batch-split on v7x
        cost_estimate=cost,
    )(x, w0, b0, w1, b1, w2, b2)


# ----------------------------------------------------------------------------
# Parameter init (mimics nn.Linear's U(-1/sqrt(fan_in), +1/sqrt(fan_in))).
# ----------------------------------------------------------------------------
def init_params(key, input_dim, hidden_dim, output_dim):
    def linear(k, fan_in, fan_out):
        kw, kb = jax.random.split(k)
        bound = 1.0 / jnp.sqrt(jnp.float32(fan_in))
        w = jax.random.uniform(kw, (fan_in, fan_out), jnp.float32,
                               minval=-bound, maxval=bound)
        b = jax.random.uniform(kb, (1, fan_out), jnp.float32,
                               minval=-bound, maxval=bound)
        return w, b

    k0, k1, k2 = jax.random.split(key, 3)
    w0, b0 = linear(k0, input_dim, hidden_dim)
    w1, b1 = linear(k1, hidden_dim, hidden_dim)
    w2, b2 = linear(k2, hidden_dim, output_dim)
    return {"w0": w0, "b0": b0, "w1": w1, "b1": b1, "w2": w2, "b2": b2}


def massnet_ref(x, p):
    """Pure-JAX float32 reference (matches the PyTorch module)."""
    h = jnp.tanh(x @ p["w0"] + p["b0"])
    h = jnp.tanh(h @ p["w1"] + p["b1"])
    return h @ p["w2"] + p["b2"]


if __name__ == "__main__":
    # Small shapes consistent with MassNet(input_dim, hidden_dim, output_dim)
    # for a 2D pendulum DAE model.
    B, input_dim, hidden_dim, output_dim = 8, 4, 32, 4

    key = jax.random.PRNGKey(0)
    k_params, k_x, k_x2 = jax.random.split(key, 3)

    params = init_params(k_params, input_dim, hidden_dim, output_dim)
    prep = prepare_params(params)   # one-time param padding, hoisted out of calls
    x = jax.random.normal(k_x, (B, input_dim), jnp.float32)

    y = jax.block_until_ready(massnet_forward(x, prep))
    y_ref = massnet_ref(x, params)
    assert y.shape == (B, output_dim)
    # f32 storage end to end; small residual tolerance only for MXU internal
    # rounding of f32 matmuls (no more bf16 input casts).
    assert jnp.allclose(y, y_ref, atol=1e-2, rtol=1e-2)

    # Exercise the multi-tile grid (2 grid steps + partial last tile).
    B2 = 24
    x2 = jax.random.normal(k_x2, (B2, input_dim), jnp.float32)
    y2 = jax.block_until_ready(massnet_forward(x2, prep))
    y2_ref = massnet_ref(x2, params)
    assert y2.shape == (B2, output_dim)
    assert jnp.allclose(y2, y2_ref, atol=1e-2, rtol=1e-2)

    print("KERNEL_OK")
</pallas_src>

<mosaic_0001>
module attributes {stable_mosaic.version = 11 : i64} {
  func.func @_massnet_kernel(%arg0: i32, %arg1: memref<8x4xf32, #tpu.memory_space<vmem>>, %arg2: memref<128x128xf32, #tpu.memory_space<vmem>>, %arg3: memref<1x128xf32, #tpu.memory_space<vmem>>, %arg4: memref<128x128xf32, #tpu.memory_space<vmem>>, %arg5: memref<1x128xf32, #tpu.memory_space<vmem>>, %arg6: memref<128x128xf32, #tpu.memory_space<vmem>>, %arg7: memref<1x128xf32, #tpu.memory_space<vmem>>, %arg8: memref<8x4xf32, #tpu.memory_space<vmem>>, %arg9: memref<8x128xf32, #tpu.memory_space<vmem>>) attributes {dimension_semantics = [#tpu.dimension_semantics<parallel>], iteration_bounds = array<i64: 1>, scalar_prefetch = 0 : i64, scratch_operands = 1 : i64, tpu.core_type = #tpu.core_type<tc>, window_params = [{transform_indices = @transform_0, window_bounds = array<i64: 8, 4>}, {pipeline_mode = #tpu.pipeline_mode<synchronous>, transform_indices = @transform_1, window_bounds = array<i64: 128, 128>}, {pipeline_mode = #tpu.pipeline_mode<synchronous>, transform_indices = @transform_2, window_bounds = array<i64: 1, 128>}, {pipeline_mode = #tpu.pipeline_mode<synchronous>, transform_indices = @transform_3, window_bounds = array<i64: 128, 128>}, {pipeline_mode = #tpu.pipeline_mode<synchronous>, transform_indices = @transform_4, window_bounds = array<i64: 1, 128>}, {pipeline_mode = #tpu.pipeline_mode<synchronous>, transform_indices = @transform_5, window_bounds = array<i64: 128, 128>}, {pipeline_mode = #tpu.pipeline_mode<synchronous>, transform_indices = @transform_6, window_bounds = array<i64: 1, 128>}, {transform_indices = @transform_7, window_bounds = array<i64: 8, 4>}]} {
    %cst = arith.constant 0.000000e+00 : f32
    %0 = vector.broadcast %cst : f32 to vector<8x128xf32>
    %c0 = arith.constant 0 : index
    %c0_0 = arith.constant 0 : index
    %1 = vector.load %arg9[%c0, %c0_0] : memref<8x128xf32, #tpu.memory_space<vmem>>, vector<8x128xf32>
    tpu.vector_store %arg9[%c0, %c0_0], %0 {strides = array<i32>} : memref<8x128xf32, #tpu.memory_space<vmem>>, vector<8x128xf32>,
    %c0_1 = arith.constant 0 : index
    %c0_2 = arith.constant 0 : index
    %2 = vector.load %arg1[%c0_1, %c0_2] : memref<8x4xf32, #tpu.memory_space<vmem>>, vector<8x4xf32>
    %c0_3 = arith.constant 0 : index
    %c0_4 = arith.constant 0 : index
    %3 = vector.load %arg9[%c0_3, %c0_4] : memref<8x128xf32, #tpu.memory_space<vmem>>, vector<8x4xf32>
    tpu.vector_store %arg9[%c0_3, %c0_4], %2 {strides = array<i32>} : memref<8x128xf32, #tpu.memory_space<vmem>>, vector<8x4xf32>,
    %c0_5 = arith.constant 0 : index
    %c0_6 = arith.constant 0 : index
    %4 = vector.load %arg9[%c0_5, %c0_6] : memref<8x128xf32, #tpu.memory_space<vmem>>, vector<8x128xf32>
    %c0_7 = arith.constant 0 : index
    %c0_8 = arith.constant 0 : index
    %5 = vector.load %arg2[%c0_7, %c0_8] : memref<128x128xf32, #tpu.memory_space<vmem>>, vector<128x128xf32>
    %cst_9 = arith.constant dense<0.000000e+00> : vector<8x128xf32>
    %6 = tpu.matmul %4, %5, %cst_9 {dimension_numbers = #tpu.dot_dimension_numbers<[1], [0], [0], [1], [0, 0, 1, 1], [], []>} : vector<8x128xf32>, vector<128x128xf32>, vector<8x128xf32> -> vector<8x128xf32>
    %c0_10 = arith.constant 0 : index
    %c0_11 = arith.constant 0 : index
    %7 = vector.load %arg3[%c0_10, %c0_11] : memref<1x128xf32, #tpu.memory_space<vmem>>, vector<1x128xf32>
    %8 = vector.broadcast %7 : vector<1x128xf32> to vector<8x128xf32>
    %9 = arith.addf %6, %8 : vector<8x128xf32>
    %10 = math.tanh %9 : vector<8x128xf32>
    %c0_12 = arith.constant 0 : index
    %c0_13 = arith.constant 0 : index
    %11 = vector.load %arg4[%c0_12, %c0_13] : memref<128x128xf32, #tpu.memory_space<vmem>>, vector<128x128xf32>
    %cst_14 = arith.constant dense<0.000000e+00> : vector<8x128xf32>
    %12 = tpu.matmul %10, %11, %cst_14 {dimension_numbers = #tpu.dot_dimension_numbers<[1], [0], [0], [1], [0, 0, 1, 1], [], []>} : vector<8x128xf32>, vector<128x128xf32>, vector<8x128xf32> -> vector<8x128xf32>
    %c0_15 = arith.constant 0 : index
    %c0_16 = arith.constant 0 : index
    %13 = vector.load %arg5[%c0_15, %c0_16] : memref<1x128xf32, #tpu.memory_space<vmem>>, vector<1x128xf32>
    %14 = vector.broadcast %13 : vector<1x128xf32> to vector<8x128xf32>
    %15 = arith.addf %12, %14 : vector<8x128xf32>
    %16 = math.tanh %15 : vector<8x128xf32>
    %c0_17 = arith.constant 0 : index
    %c0_18 = arith.constant 0 : index
    %17 = vector.load %arg6[%c0_17, %c0_18] : memref<128x128xf32, #tpu.memory_space<vmem>>, vector<128x128xf32>
    %cst_19 = arith.constant dense<0.000000e+00> : vector<8x128xf32>
    %18 = tpu.matmul %16, %17, %cst_19 {dimension_numbers = #tpu.dot_dimension_numbers<[1], [0], [0], [1], [0, 0, 1, 1], [], []>} : vector<8x128xf32>, vector<128x128xf32>, vector<8x128xf32> -> vector<8x128xf32>
    %c0_20 = arith.constant 0 : index
    %c0_21 = arith.constant 0 : index
    %19 = vector.load %arg7[%c0_20, %c0_21] : memref<1x128xf32, #tpu.memory_space<vmem>>, vector<1x128xf32>
    %20 = vector.broadcast %19 : vector<1x128xf32> to vector<8x128xf32>
    %21 = arith.addf %18, %20 : vector<8x128xf32>
    %22 = vector.extract_strided_slice %21 {offsets = [0, 0], sizes = [8, 4], strides = [1, 1]} : vector<8x128xf32> to vector<8x4xf32>
    %c0_22 = arith.constant 0 : index
    %c0_23 = arith.constant 0 : index
    %23 = vector.load %arg8[%c0_22, %c0_23] : memref<8x4xf32, #tpu.memory_space<vmem>>, vector<8x4xf32>
    tpu.vector_store %arg8[%c0_22, %c0_23], %22 {strides = array<i32>} : memref<8x4xf32, #tpu.memory_space<vmem>>, vector<8x4xf32>,
    return
  }
  func.func @transform_0(%arg0: i32) -> (i32, i32) {
    %c0_i32 = arith.constant 0 : i32
    %c0_i32_0 = arith.constant 0 : i32
    return %arg0, %c0_i32 : i32, i32
  }
  func.func @transform_1(%arg0: i32) -> (i32, i32) {
    %c0_i32 = arith.constant 0 : i32
    %c0_i32_0 = arith.constant 0 : i32
    %c0_i32_1 = arith.constant 0 : i32
    return %c0_i32, %c0_i32_0 : i32, i32
  }
  func.func @transform_2(%arg0: i32) -> (i32, i32) {
    %c0_i32 = arith.constant 0 : i32
    %c0_i32_0 = arith.constant 0 : i32
    %c0_i32_1 = arith.constant 0 : i32
    return %c0_i32, %c0_i32_0 : i32, i32
  }
  func.func @transform_3(%arg0: i32) -> (i32, i32) {
    %c0_i32 = arith.constant 0 : i32
    %c0_i32_0 = arith.constant 0 : i32
    %c0_i32_1 = arith.constant 0 : i32
    return %c0_i32, %c0_i32_0 : i32, i32
  }
  func.func @transform_4(%arg0: i32) -> (i32, i32) {
    %c0_i32 = arith.constant 0 : i32
    %c0_i32_0 = arith.constant 0 : i32
    %c0_i32_1 = arith.constant 0 : i32
    return %c0_i32, %c0_i32_0 : i32, i32
  }
  func.func @transform_5(%arg0: i32) -> (i32, i32) {
    %c0_i32 = arith.constant 0 : i32
    %c0_i32_0 = arith.constant 0 : i32
    %c0_i32_1 = arith.constant 0 : i32
    return %c0_i32, %c0_i32_0 : i32, i32
  }
  func.func @transform_6(%arg0: i32) -> (i32, i32) {
    %c0_i32 = arith.constant 0 : i32
    %c0_i32_0 = arith.constant 0 : i32
    %c0_i32_1 = arith.constant 0 : i32
    return %c0_i32, %c0_i32_0 : i32, i32
  }
  func.func @transform_7(%arg0: i32) -> (i32, i32) {
    %c0_i32 = arith.constant 0 : i32
    %c0_i32_0 = arith.constant 0 : i32
    return %arg0, %c0_i32 : i32, i32
  }
}

</mosaic_0001>

<llo_original>
// kernel: tpu_custom_call.1
$region0: #{tpu_custom_call.1}
  #allocation0 [shape = 'u32[]', space=smem, size = 0x4, offset = 0x4, fixed_abs, tag = 'smem constant byte address 0x4 - core index']
  #allocation1 [shape = 'u32[144,128]{1,0:T(1,128)}', space=vmem, size = 0x12000, scoped, tag = 'internal scratch']
  #allocation2 [shape = 'f32[8,128]{1,0:T(8,128)}', space=vmem, size = 0x1000, scoped, tag = 'scratch operand']
  %s0 = inlined_call_operand.vmem [shape: f32[8,4], index: 0, kind: input, shape index: {}]
  %s1 = inlined_call_operand.hbm [shape: f32[128,128], index: 1, kind: input, shape index: {}]
  %s2 = inlined_call_operand.vmem [shape: f32[1,128], index: 2, kind: input, shape index: {}]
  %s3 = inlined_call_operand.hbm [shape: f32[128,128], index: 3, kind: input, shape index: {}]
  %s4 = inlined_call_operand.vmem [shape: f32[1,128], index: 4, kind: input, shape index: {}]
  %s5 = inlined_call_operand.hbm [shape: f32[128,128], index: 5, kind: input, shape index: {}]
  %s6 = inlined_call_operand.vmem [shape: f32[1,128], index: 6, kind: input, shape index: {}]
  %s7 = inlined_call_operand.vmem [shape: f32[8,4], index: 7, kind: output, shape index: {}]
  %s8 = sld [smem:[#allocation0]]
  $region50: #{tpu_custom_call.1} parent=0
    _
  %s10 = ssub.s32 1, %s8
  %s11 = scalar_select 0, %s10, %s8
  $region1: #{tpu_custom_call.1} parent=0
    #allocation3 [shape = 'u8[65536]{0}', space=vmem, size = 0x10000, scoped, tag = 'input window, operand 1, single buffered']
    #allocation4 [shape = 's32[1]{0}', space=sflag, size = 0x4, scoped, tag = 'scoped memory for tpu_custom_call.1']
    #allocation5 [shape = 'u8[65536]{0}', space=vmem, size = 0x10000, scoped, tag = 'input window, operand 3, single buffered']
    #allocation6 [shape = 's32[1]{0}', space=sflag, size = 0x4, scoped, tag = 'scoped memory for tpu_custom_call.1']
    #allocation7 [shape = 'u8[65536]{0}', space=vmem, size = 0x10000, scoped, tag = 'input window, operand 5, single buffered']
    %12 = vsyncpa [#allocation4], 0
    %13 = vsyncpa [#allocation6], 0
    // Predicated region
    $region2: #{tpu_custom_call.1} parent=1 // pred_check
      _
    $region3: #{tpu_custom_call.1} parent=1 // pred_check_branch
      %15 = sbr.rel (0) target = $region5
    $region4: #{tpu_custom_call.1} parent=1 // pred_region
      _
    $region5: #{tpu_custom_call.1} parent=1 // pred_fallthru
      _
    // Predicated region
    $region6: #{tpu_custom_call.1} parent=1 // pred_check
      _
    $region7: #{tpu_custom_call.1} parent=1 // pred_check_branch
      %17 = sbr.rel (0) target = $region9
    $region8: #{tpu_custom_call.1} parent=1 // pred_region
      %s19 = ssub.s32 2048, 2048
      %20 = vsyncadd [#allocation4], %s19
      %s21 = sshll.u32 [#allocation3], 4
      %s22 = int_to_ptr.vmem [resolvable:$true] %s21
      %27 = dma.hbm_to_vmem [thread:$0]  %s1, 2048, %s22, [#allocation4], 128, 128, 8
    $region9: #{tpu_custom_call.1} parent=1 // pred_fallthru
      _
    // Predicated region
    $region10: #{tpu_custom_call.1} parent=1 // pred_check
      _
    $region11: #{tpu_custom_call.1} parent=1 // pred_check_branch
      %29 = sbr.rel (0) target = $region13
    $region12: #{tpu_custom_call.1} parent=1 // pred_region
      _
    $region13: #{tpu_custom_call.1} parent=1 // pred_fallthru
      _
    // Predicated region
    $region14: #{tpu_custom_call.1} parent=1 // pred_check
      _
    $region15: #{tpu_custom_call.1} parent=1 // pred_check_branch
      %31 = sbr.rel (0) target = $region17
    $region16: #{tpu_custom_call.1} parent=1 // pred_region
      %s33 = ssub.s32 2048, 2048
      %34 = vsyncadd [#allocation6], %s33
      %s35 = sshll.u32 [#allocation5], 4
      %s36 = int_to_ptr.vmem [resolvable:$true] %s35
      %41 = dma.hbm_to_vmem [thread:$0]  %s3, 2048, %s36, [#allocation6], 128, 128, 8
    $region17: #{tpu_custom_call.1} parent=1 // pred_fallthru
      _
    // Predicated region
    $region18: #{tpu_custom_call.1} parent=1 // pred_check
      _
    $region19: #{tpu_custom_call.1} parent=1 // pred_check_branch
      %43 = sbr.rel (0) target = $region21
    $region20: #{tpu_custom_call.1} parent=1 // pred_region
      _
    $region21: #{tpu_custom_call.1} parent=1 // pred_fallthru
      _
    // Predicated region
    $region22: #{tpu_custom_call.1} parent=1 // pred_check
      _
    $region23: #{tpu_custom_call.1} parent=1 // pred_check_branch
      %45 = sbr.rel (0) target = $region25
    $region24: #{tpu_custom_call.1} parent=1 // pred_region
      %s47 = ssub.s32 2048, 2048
      %48 = vsyncadd [#allocation6], %s47
      %s49 = sshll.u32 [#allocation7], 4
      %s50 = int_to_ptr.vmem [resolvable:$true] %s49
      %55 = dma.hbm_to_vmem [thread:$0]  %s5, 2048, %s50, [#allocation6], 128, 128, 8
    $region25: #{tpu_custom_call.1} parent=1 // pred_fallthru
      _
    // Predicated region
    $region26: #{tpu_custom_call.1} parent=1 // pred_check
      _
    $region27: #{tpu_custom_call.1} parent=1 // pred_check_branch
      %57 = sbr.rel (0) target = $region29
    $region28: #{tpu_custom_call.1} parent=1 // pred_region
      _
    $region29: #{tpu_custom_call.1} parent=1 // pred_fallthru
      _
    // Predicated region
    $region30: #{tpu_custom_call.1} parent=1 // pred_check
      _
    $region31: #{tpu_custom_call.1} parent=1 // pred_check_branch
      %59 = sbr.rel (0) target = $region33
    $region32: #{tpu_custom_call.1} parent=1 // pred_region
      %60 = dma.done [#allocation4], 2048
    $region33: #{tpu_custom_call.1} parent=1 // pred_fallthru
      _
    // Predicated region
    $region34: #{tpu_custom_call.1} parent=1 // pred_check
      _
    $region35: #{tpu_custom_call.1} parent=1 // pred_check_branch
      %62 = sbr.rel (0) target = $region37
    $region36: #{tpu_custom_call.1} parent=1 // pred_region
      %63 = dma.done [#allocation6], 2048
    $region37: #{tpu_custom_call.1} parent=1 // pred_fallthru
      _
    // Predicated region
    $region38: #{tpu_custom_call.1} parent=1 // pred_check
      _
    $region39: #{tpu_custom_call.1} parent=1 // pred_check_branch
      %65 = sbr.rel (0) target = $region41
    $region40: #{tpu_custom_call.1} parent=1 // pred_region
      %66 = dma.done [#allocation6], 2048
    $region41: #{tpu_custom_call.1} parent=1 // pred_fallthru
      _
    %67 = vst [vmem:[#allocation2] sm:$0xff] 0.0
    %v68 = vld [vmem:[%s0] sm:$0xff]
    %vm69 = vcmask 31744
    %70 = vst.msk [vmem:[#allocation2] sm:$0xff] %vm69, %v68
    %v71 = vld [vmem:[#allocation2] sm:$0xff]
    %v72 = vld [vmem:[#allocation3] sm:$0xff]
    %v73 = vld [vmem:[#allocation3 + $0x8] sm:$0xff]
    %v74 = vld [vmem:[#allocation3 + $0x10] sm:$0xff]
    %v75 = vld [vmem:[#allocation3 + $0x18] sm:$0xff]
    %v76 = vld [vmem:[#allocation3 + $0x20] sm:$0xff]
    %v77 = vld [vmem:[#allocation3 + $0x28] sm:$0xff]
    %v78 = vld [vmem:[#allocation3 + $0x30] sm:$0xff]
    %v79 = vld [vmem:[#allocation3 + $0x38] sm:$0xff]
    %v80 = vld [vmem:[#allocation3 + $0x40] sm:$0xff]
    %v81 = vld [vmem:[#allocation3 + $0x48] sm:$0xff]
    %v82 = vld [vmem:[#allocation3 + $0x50] sm:$0xff]
    %v83 = vld [vmem:[#allocation3 + $0x58] sm:$0xff]
    %v84 = vld [vmem:[#allocation3 + $0x60] sm:$0xff]
    %v85 = vld [vmem:[#allocation3 + $0x68] sm:$0xff]
    %v86 = vld [vmem:[#allocation3 + $0x70] sm:$0xff]
    %v87 = vld [vmem:[#allocation3 + $0x78] sm:$0xff]
    %v88 = vld [vmem:[%s2] sm:$0x1]
    %v90 = vlaneseq
    %v91 = vshrl.u32 %v90, 7
    %v92 = vsub.s32 0, %v91
    %v93 = vrot.slane %v88, %v92
    %95 = vmatprep.subr.mxu0 0.0
    %96 = vmatpush1.msra.mxu0 %v72
    %97 = vmatprep.subr.mxu0 0.0
    %98 = vmatpush1.msra.mxu0 %v73
    %99 = vmatprep.subr.mxu0 0.0
    %100 = vmatpush1.msra.mxu0 %v74
    %101 = vmatprep.subr.mxu0 0.0
    %102 = vmatpush1.msra.mxu0 %v75
    %103 = vmatprep.subr.mxu0 0.0
    %104 = vmatpush1.msra.mxu0 %v76
    %105 = vmatprep.subr.mxu0 0.0
    %106 = vmatpush1.msra.mxu0 %v77
    %107 = vmatprep.subr.mxu0 0.0
    %108 = vmatpush1.msra.mxu0 %v78
    %109 = vmatprep.subr.mxu0 0.0
    %110 = vmatpush1.msra.mxu0 %v79
    %111 = vmatprep.subr.mxu0 0.0
    %112 = vmatpush1.msra.mxu0 %v80
    %113 = vmatprep.subr.mxu0 0.0
    %114 = vmatpush1.msra.mxu0 %v81
    %115 = vmatprep.subr.mxu0 0.0
    %116 = vmatpush1.msra.mxu0 %v82
    %117 = vmatprep.subr.mxu0 0.0
    %118 = vmatpush1.msra.mxu0 %v83
    %119 = vmatprep.subr.mxu0 0.0
    %120 = vmatpush1.msra.mxu0 %v84
    %121 = vmatprep.subr.mxu0 0.0
    %122 = vmatpush1.msra.mxu0 %v85
    %123 = vmatprep.subr.mxu0 0.0
    %124 = vmatpush1.msra.mxu0 %v86
    %125 = vmatprep.subr.mxu0 0.0
    %126 = vmatpush1.msra.mxu0 %v87
    %127 = vmatprep.subr.mxu0 0.0
    %128 = vmatpush1.msra.mxu0 0.0
    %129 = vmatprep.subr.mxu0 0.0
    %130 = vmatpush1.msra.mxu0 0.0
    %131 = vmatprep.subr.mxu0 0.0
    %132 = vmatpush1.msra.mxu0 0.0
    %133 = vmatprep.subr.mxu0 0.0
    %134 = vmatpush1.msra.mxu0 0.0
    %135 = vmatprep.subr.mxu0 0.0
    %136 = vmatpush1.msra.mxu0 0.0
    %137 = vmatprep.subr.mxu0 0.0
    %138 = vmatpush1.msra.mxu0 0.0
    %139 = vmatprep.subr.mxu0 0.0
    %140 = vmatpush1.msra.mxu0 0.0
    %141 = vmatprep.subr.mxu0 0.0
    %142 = vmatpush1.msra.mxu0 0.0
    %143 = vmatprep.subr.mxu0 0.0
    %144 = vmatpush1.msra.mxu0 0.0
    %145 = vmatprep.subr.mxu0 0.0
    %146 = vmatpush1.msra.mxu0 0.0
    %147 = vmatprep.subr.mxu0 0.0
    %148 = vmatpush1.msra.mxu0 0.0
    %149 = vmatprep.subr.mxu0 0.0
    %150 = vmatpush1.msra.mxu0 0.0
    %151 = vmatprep.subr.mxu0 0.0
    %152 = vmatpush1.msra.mxu0 0.0
    %153 = vmatprep.subr.mxu0 0.0
    %154 = vmatpush1.msra.mxu0 0.0
    %155 = vmatprep.subr.mxu0 0.0
    %156 = vmatpush1.msra.mxu0 0.0
    %157 = vmatprep.subr.mxu0 0.0
    %158 = vmatpush1.msra.mxu0 0.0
    %159 = vmatprep.mubr.f32.mxu0 0.0
    %160 = vmatmul.mubr.f32.gmra.mrb[0].mxu0 %v71
    %v161 = vpop.f32.mrb[0].mxu0
    %v162 = vadd.f32 %v93, %v161
    %v163 = vpop.f32.mrb[0].mxu0
    %164 = vdwg.mxu0
    %v165 = vtanh.pop %v162
    %v166 = vld [vmem:[#allocation5] sm:$0xff]
    %v167 = vld [vmem:[#allocation5 + $0x8] sm:$0xff]
    %v168 = vld [vmem:[#allocation5 + $0x10] sm:$0xff]
    %v169 = vld [vmem:[#allocation5 + $0x18] sm:$0xff]
    %v170 = vld [vmem:[#allocation5 + $0x20] sm:$0xff]
    %v171 = vld [vmem:[#allocation5 + $0x28] sm:$0xff]
    %v172 = vld [vmem:[#allocation5 + $0x30] sm:$0xff]
    %v173 = vld [vmem:[#allocation5 + $0x38] sm:$0xff]
    %v174 = vld [vmem:[#allocation5 + $0x40] sm:$0xff]
    %v175 = vld [vmem:[#allocation5 + $0x48] sm:$0xff]
    %v176 = vld [vmem:[#allocation5 + $0x50] sm:$0xff]
    %v177 = vld [vmem:[#allocation5 + $0x58] sm:$0xff]
    %v178 = vld [vmem:[#allocation5 + $0x60] sm:$0xff]
    %v179 = vld [vmem:[#allocation5 + $0x68] sm:$0xff]
    %v180 = vld [vmem:[#allocation5 + $0x70] sm:$0xff]
    %v181 = vld [vmem:[#allocation5 + $0x78] sm:$0xff]
    %v182 = vld [vmem:[%s4] sm:$0x1]
    %v184 = vlaneseq
    %v185 = vshrl.u32 %v184, 7
    %v186 = vsub.s32 0, %v185
    %v187 = vrot.slane %v182, %v186
    %189 = vmatprep.subr.mxu0 0.0
    %190 = vmatpush1.msra.mxu0 %v166
    %191 = vmatprep.subr.mxu0 0.0
    %192 = vmatpush1.msra.mxu0 %v167
    %193 = vmatprep.subr.mxu0 0.0
    %194 = vmatpush1.msra.mxu0 %v168
    %195 = vmatprep.subr.mxu0 0.0
    %196 = vmatpush1.msra.mxu0 %v169
    %197 = vmatprep.subr.mxu0 0.0
    %198 = vmatpush1.msra.mxu0 %v170
    %199 = vmatprep.subr.mxu0 0.0
    %200 = vmatpush1.msra.mxu0 %v171
    %201 = vmatprep.subr.mxu0 0.0
    %202 = vmatpush1.msra.mxu0 %v172
    %203 = vmatprep.subr.mxu0 0.0
    %204 = vmatpush1.msra.mxu0 %v173
    %205 = vmatprep.subr.mxu0 0.0
    %206 = vmatpush1.msra.mxu0 %v174
    %207 = vmatprep.subr.mxu0 0.0
    %208 = vmatpush1.msra.mxu0 %v175
    %209 = vmatprep.subr.mxu0 0.0
    %210 = vmatpush1.msra.mxu0 %v176
    %211 = vmatprep.subr.mxu0 0.0
    %212 = vmatpush1.msra.mxu0 %v177
    %213 = vmatprep.subr.mxu0 0.0
    %214 = vmatpush1.msra.mxu0 %v178
    %215 = vmatprep.subr.mxu0 0.0
    %216 = vmatpush1.msra.mxu0 %v179
    %217 = vmatprep.subr.mxu0 0.0
    %218 = vmatpush1.msra.mxu0 %v180
    %219 = vmatprep.subr.mxu0 0.0
    %220 = vmatpush1.msra.mxu0 %v181
    %221 = vmatprep.subr.mxu0 0.0
    %222 = vmatpush1.msra.mxu0 0.0
    %223 = vmatprep.subr.mxu0 0.0
    %224 = vmatpush1.msra.mxu0 0.0
    %225 = vmatprep.subr.mxu0 0.0
    %226 = vmatpush1.msra.mxu0 0.0
    %227 = vmatprep.subr.mxu0 0.0
    %228 = vmatpush1.msra.mxu0 0.0
    %229 = vmatprep.subr.mxu0 0.0
    %230 = vmatpush1.msra.mxu0 0.0
    %231 = vmatprep.subr.mxu0 0.0
    %232 = vmatpush1.msra.mxu0 0.0
    %233 = vmatprep.subr.mxu0 0.0
    %234 = vmatpush1.msra.mxu0 0.0
    %235 = vmatprep.subr.mxu0 0.0
    %236 = vmatpush1.msra.mxu0 0.0
    %237 = vmatprep.subr.mxu0 0.0
    %238 = vmatpush1.msra.mxu0 0.0
    %239 = vmatprep.subr.mxu0 0.0
    %240 = vmatpush1.msra.mxu0 0.0
    %241 = vmatprep.subr.mxu0 0.0
    %242 = vmatpush1.msra.mxu0 0.0
    %243 = vmatprep.subr.mxu0 0.0
    %244 = vmatpush1.msra.mxu0 0.0
    %245 = vmatprep.subr.mxu0 0.0
    %246 = vmatpush1.msra.mxu0 0.0
    %247 = vmatprep.subr.mxu0 0.0
    %248 = vmatpush1.msra.mxu0 0.0
    %249 = vmatprep.subr.mxu0 0.0
    %250 = vmatpush1.msra.mxu0 0.0
    %251 = vmatprep.subr.mxu0 0.0
    %252 = vmatpush1.msra.mxu0 0.0
    %253 = vmatprep.mubr.f32.mxu0 0.0
    %254 = vmatmul.mubr.f32.gmra.mrb[0].mxu0 %v165
    %v255 = vpop.f32.mrb[0].mxu0
    %v256 = vadd.f32 %v187, %v255
    %v257 = vpop.f32.mrb[0].mxu0
    %258 = vdwg.mxu0
    %v259 = vtanh.pop %v256
    %v260 = vld [vmem:[#allocation7] sm:$0xff]
    %v261 = vld [vmem:[#allocation7 + $0x8] sm:$0xff]
    %v262 = vld [vmem:[#allocation7 + $0x10] sm:$0xff]
    %v263 = vld [vmem:[#allocation7 + $0x18] sm:$0xff]
    %v264 = vld [vmem:[#allocation7 + $0x20] sm:$0xff]
    %v265 = vld [vmem:[#allocation7 + $0x28] sm:$0xff]
    %v266 = vld [vmem:[#allocation7 + $0x30] sm:$0xff]
    %v267 = vld [vmem:[#allocation7 + $0x38] sm:$0xff]
    %v268 = vld [vmem:[#allocation7 + $0x40] sm:$0xff]
    %v269 = vld [vmem:[#allocation7 + $0x48] sm:$0xff]
    %v270 = vld [vmem:[#allocation7 + $0x50] sm:$0xff]
    %v271 = vld [vmem:[#allocation7 + $0x58] sm:$0xff]
    %v272 = vld [vmem:[#allocation7 + $0x60] sm:$0xff]
    %v273 = vld [vmem:[#allocation7 + $0x68] sm:$0xff]
    %v274 = vld [vmem:[#allocation7 + $0x70] sm:$0xff]
    %v275 = vld [vmem:[#allocation7 + $0x78] sm:$0xff]
    %v276 = vld [vmem:[%s6] sm:$0x1]
    %v278 = vlaneseq
    %v279 = vshrl.u32 %v278, 7
    %v280 = vsub.s32 0, %v279
    %v281 = vrot.slane %v276, %v280
    %283 = vmatprep.subr.mxu0 0.0
    %284 = vmatpush1.msra.mxu0 %v260
    %285 = vmatprep.subr.mxu0 0.0
    %286 = vmatpush1.msra.mxu0 %v261
    %287 = vmatprep.subr.mxu0 0.0
    %288 = vmatpush1.msra.mxu0 %v262
    %289 = vmatprep.subr.mxu0 0.0
    %290 = vmatpush1.msra.mxu0 %v263
    %291 = vmatprep.subr.mxu0 0.0
    %292 = vmatpush1.msra.mxu0 %v264
    %293 = vmatprep.subr.mxu0 0.0
    %294 = vmatpush1.msra.mxu0 %v265
    %295 = vmatprep.subr.mxu0 0.0
    %296 = vmatpush1.msra.mxu0 %v266
    %297 = vmatprep.subr.mxu0 0.0
    %298 = vmatpush1.msra.mxu0 %v267
    %299 = vmatprep.subr.mxu0 0.0
    %300 = vmatpush1.msra.mxu0 %v268
    %301 = vmatprep.subr.mxu0 0.0
    %302 = vmatpush1.msra.mxu0 %v269
    %303 = vmatprep.subr.mxu0 0.0
    %304 = vmatpush1.msra.mxu0 %v270
    %305 = vmatprep.subr.mxu0 0.0
    %306 = vmatpush1.msra.mxu0 %v271
    %307 = vmatprep.subr.mxu0 0.0
    %308 = vmatpush1.msra.mxu0 %v272
    %309 = vmatprep.subr.mxu0 0.0
    %310 = vmatpush1.msra.mxu0 %v273
    %311 = vmatprep.subr.mxu0 0.0
    %312 = vmatpush1.msra.mxu0 %v274
    %313 = vmatprep.subr.mxu0 0.0
    %314 = vmatpush1.msra.mxu0 %v275
    %315 = vmatprep.subr.mxu0 0.0
    %316 = vmatpush1.msra.mxu0 0.0
    %317 = vmatprep.subr.mxu0 0.0
    %318 = vmatpush1.msra.mxu0 0.0
    %319 = vmatprep.subr.mxu0 0.0
    %320 = vmatpush1.msra.mxu0 0.0
    %321 = vmatprep.subr.mxu0 0.0
    %322 = vmatpush1.msra.mxu0 0.0
    %323 = vmatprep.subr.mxu0 0.0
    %324 = vmatpush1.msra.mxu0 0.0
    %325 = vmatprep.subr.mxu0 0.0
    %326 = vmatpush1.msra.mxu0 0.0
    %327 = vmatprep.subr.mxu0 0.0
    %328 = vmatpush1.msra.mxu0 0.0
    %329 = vmatprep.subr.mxu0 0.0
    %330 = vmatpush1.msra.mxu0 0.0
    %331 = vmatprep.subr.mxu0 0.0
    %332 = vmatpush1.msra.mxu0 0.0
    %333 = vmatprep.subr.mxu0 0.0
    %334 = vmatpush1.msra.mxu0 0.0
    %335 = vmatprep.subr.mxu0 0.0
    %336 = vmatpush1.msra.mxu0 0.0
    %337 = vmatprep.subr.mxu0 0.0
    %338 = vmatpush1.msra.mxu0 0.0
    %339 = vmatprep.subr.mxu0 0.0
    %340 = vmatpush1.msra.mxu0 0.0
    %341 = vmatprep.subr.mxu0 0.0
    %342 = vmatpush1.msra.mxu0 0.0
    %343 = vmatprep.subr.mxu0 0.0
    %344 = vmatpush1.msra.mxu0 0.0
    %345 = vmatprep.subr.mxu0 0.0
    %346 = vmatpush1.msra.mxu0 0.0
    %347 = vmatprep.mubr.f32.mxu0 0.0
    %348 = vmatmul.mubr.f32.gmra.mrb[0].mxu0 %v259
    %v349 = vpop.f32.mrb[0].mxu0
    %v350 = vadd.f32 %v281, %v349
    %v351 = vpop.f32.mrb[0].mxu0
    %352 = vdwg.mxu0
    %353 = vst.msk [vmem:[%s7] sm:$0xff] %vm69, %v350
    // Predicated region
    $region42: #{tpu_custom_call.1} parent=1 // pred_check
      _
    $region43: #{tpu_custom_call.1} parent=1 // pred_check_branch
      %355 = sbr.rel (0) target = $region45
    $region44: #{tpu_custom_call.1} parent=1 // pred_region
      _
    $region45: #{tpu_custom_call.1} parent=1 // pred_fallthru
      _
    // Predicated region
    $region46: #{tpu_custom_call.1} parent=1 // pred_check
      _
    $region47: #{tpu_custom_call.1} parent=1 // pred_check_branch
      %357 = sbr.rel (0) target = $region49
    $region48: #{tpu_custom_call.1} parent=1 // pred_region
      _
    $region49: #{tpu_custom_call.1} parent=1 // pred_fallthru
      _
    %358 = vsyncpa [#allocation4], 1
    %359 = vsyncpa [#allocation6], 1

</llo_original>
